<compile_context>
chip_gen: v6e
topology: v6e:2x2x1
jax: 0.10.0
libtpu: 0.0.40
codegen_flags: <defaults>
</compile_context>

<pallas_src>
import functools
import math

import jax
import jax.numpy as jnp
from jax.experimental import pallas as pl
from jax.experimental.pallas import tpu as pltpu


# ----------------------------- kernels --------------------------------------


def _concat_col_kernel(x_ref, y_ref, o_ref, *, n_x_blocks):
    """Column-tiled copy: output block j comes from x (j < n_x_blocks) or y."""
    j = pl.program_id(1)

    @pl.when(j < n_x_blocks)
    def _():
        o_ref[...] = x_ref[...]

    @pl.when(j >= n_x_blocks)
    def _():
        o_ref[...] = y_ref[...]


def _concat_row_kernel(x_ref, y_ref, o_ref):
    """Full-row fallback: x into output cols [0, n1), y into [n1, n1+n2)."""
    n1 = x_ref.shape[-1]
    n2 = y_ref.shape[-1]
    o_ref[:, pl.ds(0, n1)] = x_ref[...]
    # TODO(synk): if n1 % 128 != 0 this store is lane-misaligned (masked vst);
    # a strided HBM DMA write would avoid that cliff.
    o_ref[:, pl.ds(n1, n2)] = y_ref[...]


# ----------------------------- helpers --------------------------------------


def _divisors(n):
    out = []
    i = 1
    while i * i <= n:
        if n % i == 0:
            out.append(i)
            if i != n // i:
                out.append(n // i)
        i += 1
    return sorted(out)


def _vmem_limit(footprint_bytes):
    # Double-buffered footprint + 25% + a few MiB for Mosaic internal scratch,
    # clamped to stay inside v7x's 64 MiB physical VMEM per TensorCore.
    return int(min(64 << 20, max(16 << 20, footprint_bytes * 1.25 + (4 << 20))))


def _concat_2d(x2, y2, n1, n2, B, dtype, itemsize, g, vmem_budget_bytes):
    n_out = n1 + n2
    # Batch tile: full B for small batches, otherwise 8 rows (keeps the
    # second-to-last block dim a multiple of 8, per the (8,128) rule).
    tile_b = 8 if (B > 8 and B % 8 == 0) else B
    grid_b = B // tile_b

    # Column tile: widest multiple-of-128 common divisor of n1/n2 that
    # (a) keeps the double-buffered 3-tile working set inside the budget and
    # (b) leaves >= 4 total grid steps for real software pipelining, but never
    # narrower than 512 lanes just to add depth.
    per_tile_elems = max(128, vmem_budget_bytes // (6 * tile_b * itemsize))
    depth_cap = max(512, (grid_b * n_out) // 4)
    cap = min(per_tile_elems, depth_cap)
    cands = [128 * d for d in _divisors(g // 128)]
    fitting = [c for c in cands if c <= cap]
    tc = max(fitting) if fitting else min(cands)

    n_x_blocks = n1 // tc
    n_y_blocks = n2 // tc
    grid = (grid_b, n_x_blocks + n_y_blocks)

    footprint = 2 * 3 * tile_b * tc * itemsize  # 3 tiles, double-buffered

    kernel = functools.partial(_concat_col_kernel, n_x_blocks=n_x_blocks)
    return pl.pallas_call(
        kernel,
        out_shape=jax.ShapeDtypeStruct((B, n_out), dtype),
        grid_spec=pltpu.PrefetchScalarGridSpec(
            num_scalar_prefetch=0,
            grid=grid,
            in_specs=[
                # Hold the last x block (index unchanged -> no re-DMA) once the
                # column axis moves into the y half, and vice versa for y.
                pl.BlockSpec((tile_b, tc),
                             lambda i, j: (i, jnp.minimum(j, n_x_blocks - 1))),
                pl.BlockSpec((tile_b, tc),
                             lambda i, j: (i, jnp.maximum(j - n_x_blocks, 0))),
            ],
            out_specs=pl.BlockSpec((tile_b, tc), lambda i, j: (i, j)),
        ),
        compiler_params=pltpu.CompilerParams(
            dimension_semantics=("parallel", "parallel"),
            vmem_limit_bytes=_vmem_limit(footprint),
        ),
    )(x2, y2)


def _concat_1d(x2, y2, n1, n2, B, dtype, itemsize, vmem_budget_bytes):
    # Fallback for non-128-aligned halves: full-width rows, batch-only grid.
    n_out = n1 + n2
    row_bytes = 2 * (n1 + n2 + n_out) * itemsize  # double-buffered per row
    max_rows = max(1, vmem_budget_bytes // row_bytes)
    if B <= max_rows:
        tile_b = B
    else:
        tile_b = B  # full batch unless a clean multiple-of-8 divisor fits
        t = (min(max_rows, B) // 8) * 8
        while t >= 8:
            if B % t == 0:
                tile_b = t
                break
            t -= 8
    grid = (B // tile_b,)
    footprint = 2 * tile_b * (n1 + n2 + n_out) * itemsize

    return pl.pallas_call(
        _concat_row_kernel,
        out_shape=jax.ShapeDtypeStruct((B, n_out), dtype),
        grid_spec=pltpu.PrefetchScalarGridSpec(
            num_scalar_prefetch=0,
            grid=grid,
            in_specs=[
                pl.BlockSpec((tile_b, n1), lambda i: (i, 0)),
                pl.BlockSpec((tile_b, n2), lambda i: (i, 0)),
            ],
            out_specs=pl.BlockSpec((tile_b, n_out), lambda i: (i, 0)),
        ),
        compiler_params=pltpu.CompilerParams(
            dimension_semantics=("parallel",),
            vmem_limit_bytes=_vmem_limit(footprint),
        ),
    )(x2, y2)


# ----------------------------- public wrapper -------------------------------


def concatenate(layer_1, layer_2, *, vmem_budget_bytes=8 * 1024 * 1024):
    """Pallas equivalent of torch.cat((layer_1, layer_2), dim=1) for rank>=2."""
    assert layer_1.ndim >= 2 and layer_2.ndim >= 2
    assert layer_1.shape[0] == layer_2.shape[0], "batch dims must match"
    assert layer_1.shape[2:] == layer_2.shape[2:], "trailing dims must match"
    assert layer_1.dtype == layer_2.dtype, "dtypes must match"

    B = int(layer_1.shape[0])
    c1, c2 = int(layer_1.shape[1]), int(layer_2.shape[1])
    inner = 1
    for d in layer_1.shape[2:]:
        inner *= int(d)
    n1, n2 = c1 * inner, c2 * inner
    dtype = layer_1.dtype
    itemsize = jnp.dtype(dtype).itemsize

    # Free, contiguous reshapes: keep original dtype, no wrapper-side copies.
    x2 = layer_1.reshape(B, n1)
    y2 = layer_2.reshape(B, n2)

    g = math.gcd(n1, n2)
    if g % 128 == 0:
        out2 = _concat_2d(x2, y2, n1, n2, B, dtype, itemsize, g,
                          vmem_budget_bytes)
    else:
        out2 = _concat_1d(x2, y2, n1, n2, B, dtype, itemsize,
                          vmem_budget_bytes)

    return out2.reshape((B, c1 + c2) + tuple(layer_1.shape[2:]))


# ----------------------------- self-test ------------------------------------

if __name__ == "__main__":
    key = jax.random.PRNGKey(0)
    k1, k2, k3, k4 = jax.random.split(key, 4)

    # NCHW inputs, matching the PyTorch module's forward(layer_1, layer_2).
    B, C1, C2, H, W = 2, 4, 4, 16, 16
    layer_1 = jax.random.normal(k1, (B, C1, H, W), dtype=jnp.float32)
    layer_2 = jax.random.normal(k2, (B, C2, H, W), dtype=jnp.float32)

    out = concatenate(layer_1, layer_2)
    jax.block_until_ready(out)

    ref = jnp.concatenate((layer_1, layer_2), axis=1)
    assert out.shape == ref.shape, (out.shape, ref.shape)
    assert bool(jnp.array_equal(out, ref)), "f32 concat mismatch"

    # Second check: unequal channel counts + bf16 (no wrapper-side casts).
    layer_1b = jax.random.normal(k3, (B, 4, H, W), dtype=jnp.bfloat16)
    layer_2b = jax.random.normal(k4, (B, 6, H, W), dtype=jnp.bfloat16)
    out_b = concatenate(layer_1b, layer_2b)
    jax.block_until_ready(out_b)
    ref_b = jnp.concatenate((layer_1b, layer_2b), axis=1)
    assert out_b.shape == ref_b.shape, (out_b.shape, ref_b.shape)
    assert bool(jnp.array_equal(out_b, ref_b)), "bf16 concat mismatch"

    print("KERNEL_OK")
</pallas_src>

<mosaic_0001>
module attributes {stable_mosaic.version = 11 : i64} {
  func.func @_concat_col_kernel(%arg0: i32, %arg1: i32, %arg2: memref<2x512xf32, #tpu.memory_space<vmem>>, %arg3: memref<2x512xf32, #tpu.memory_space<vmem>>, %arg4: memref<2x512xf32, #tpu.memory_space<vmem>>) attributes {dimension_semantics = [#tpu.dimension_semantics<parallel>, #tpu.dimension_semantics<parallel>], iteration_bounds = array<i64: 1, 4>, scalar_prefetch = 0 : i64, scratch_operands = 0 : i64, tpu.core_type = #tpu.core_type<tc>, window_params = [{transform_indices = @transform_0, window_bounds = array<i64: 2, 512>}, {transform_indices = @transform_1, window_bounds = array<i64: 2, 512>}, {transform_indices = @transform_2, window_bounds = array<i64: 2, 512>}]} {
    %c2_i32 = arith.constant 2 : i32
    %0 = arith.cmpi slt, %arg1, %c2_i32 : i32
    %1 = arith.extui %0 : i1 to i32
    %c0_i32 = arith.constant 0 : i32
    %2 = arith.cmpi ne, %1, %c0_i32 : i32
    scf.if %2 {
      %c0 = arith.constant 0 : index
      %c0_2 = arith.constant 0 : index
      %6 = vector.load %arg2[%c0, %c0_2] : memref<2x512xf32, #tpu.memory_space<vmem>>, vector<2x512xf32>
      %c0_3 = arith.constant 0 : index
      %c0_4 = arith.constant 0 : index
      %7 = vector.load %arg4[%c0_3, %c0_4] : memref<2x512xf32, #tpu.memory_space<vmem>>, vector<2x512xf32>
      tpu.vector_store %arg4[%c0_3, %c0_4], %6 {strides = array<i32>} : memref<2x512xf32, #tpu.memory_space<vmem>>, vector<2x512xf32>,
    } else {
    }
    %c2_i32_0 = arith.constant 2 : i32
    %3 = arith.cmpi sge, %arg1, %c2_i32_0 : i32
    %4 = arith.extui %3 : i1 to i32
    %c0_i32_1 = arith.constant 0 : i32
    %5 = arith.cmpi ne, %4, %c0_i32_1 : i32
    scf.if %5 {
      %c0 = arith.constant 0 : index
      %c0_2 = arith.constant 0 : index
      %6 = vector.load %arg3[%c0, %c0_2] : memref<2x512xf32, #tpu.memory_space<vmem>>, vector<2x512xf32>
      %c0_3 = arith.constant 0 : index
      %c0_4 = arith.constant 0 : index
      %7 = vector.load %arg4[%c0_3, %c0_4] : memref<2x512xf32, #tpu.memory_space<vmem>>, vector<2x512xf32>
      tpu.vector_store %arg4[%c0_3, %c0_4], %6 {strides = array<i32>} : memref<2x512xf32, #tpu.memory_space<vmem>>, vector<2x512xf32>,
    } else {
    }
    return
  }
  func.func @transform_0(%arg0: i32, %arg1: i32) -> (i32, i32) {
    %c1_i32 = arith.constant 1 : i32
    %0 = arith.minsi %arg1, %c1_i32 : i32
    %c0_i32 = arith.constant 0 : i32
    return %arg0, %0 : i32, i32
  }
  func.func @transform_1(%arg0: i32, %arg1: i32) -> (i32, i32) {
    %c2_i32 = arith.constant 2 : i32
    %0 = arith.subi %arg1, %c2_i32 : i32
    %c0_i32 = arith.constant 0 : i32
    %1 = arith.maxsi %0, %c0_i32 : i32
    %c0_i32_0 = arith.constant 0 : i32
    return %arg0, %1 : i32, i32
  }
  func.func @transform_2(%arg0: i32, %arg1: i32) -> (i32, i32) {
    %c0_i32 = arith.constant 0 : i32
    return %arg0, %arg1 : i32, i32
  }
}

</mosaic_0001>

<llo_original>
// kernel: tpu_custom_call.1
$region0: #{tpu_custom_call.1}
  #allocation0 [shape = 'u32[]', space=smem, size = 0x4, offset = 0x4, fixed_abs, tag = 'smem constant byte address 0x4 - core index']
  #allocation1 [shape = 'u32[144,128]{1,0:T(1,128)}', space=vmem, size = 0x12000, scoped, tag = 'internal scratch']
  %s0 = inlined_call_operand.hbm [shape: f32[2,1024], index: 0, kind: input, shape index: {}]
  %s1 = inlined_call_operand.hbm [shape: f32[2,1024], index: 1, kind: input, shape index: {}]
  %s2 = inlined_call_operand.hbm [shape: f32[2,2048], index: 2, kind: output, shape index: {}]
  %s3 = sld [smem:[#allocation0]]
  $region57: #{tpu_custom_call.1} parent=0
    _
  %s5 = ssub.s32 1, %s3
  %s6 = scalar_select 0, %s5, %s3
  $region1: #{tpu_custom_call.1} parent=0
    #allocation2 [shape = 'u8[8192]{0}', space=vmem, size = 0x2000, scoped, tag = 'input window, operand 0']
    #allocation3 [shape = 's32[2]{0}', space=sflag, size = 0x8, scoped, tag = 'scoped memory for tpu_custom_call.1']
    #allocation4 [shape = 's32[2]{0}', space=sflag, size = 0x8, scoped, tag = 'scoped memory for tpu_custom_call.1']
    #allocation5 [shape = 'u8[8192]{0}', space=vmem, size = 0x2000, scoped, tag = 'input window, operand 1']
    #allocation6 [shape = 's32[2]{0}', space=sflag, size = 0x8, scoped, tag = 'scoped memory for tpu_custom_call.1']
    #allocation7 [shape = 'u8[8192]{0}', space=vmem, size = 0x2000, scoped, tag = 'output window, operand 0']
    %7 = vsyncpa [#allocation3], 0
    %s8 = scalar_lea.sflag [#allocation3], 1
    %9 = vsyncpa %s8, 0
    %10 = vsyncpa [#allocation6], 0
    %s11 = scalar_lea.sflag [#allocation6], 1
    %12 = vsyncpa %s11, 0
    %13 = vsyncpa [#allocation4], 0
    %s14 = scalar_lea.sflag [#allocation4], 1
    %15 = vsyncpa %s14, 0
    loop: start=0, step=1, limit=6
    $region2: #{tpu_custom_call.1} parent=1 // loop_pre_header
      _
    $region3: #{tpu_custom_call.1} parent=1 // loop_header
      %s17 = sphi 0, %s21
      %p18 = scmp.ge.s32.totalorder %s17, 6
      %s24 = sphi 0, %s36
      %s25 = sphi 0, %s32
      %s26 = sphi 0, %s24
      %s27 = sphi 0, %s25
      %s28 = sphi 0, %s26
      %s29 = sphi 0, %s27
      %s45 = sphi 0, %s47
      %s48 = sphi 0, %s45
      %s49 = sphi 0, %s48
      %s65 = sphi 0, %s49
      %s79 = sphi 0, %s81
      %s82 = sphi 0, %s79
      %s83 = sphi 0, %s82
      %s99 = sphi 0, %s83
      %s107 = sphi 0, %s109
      %s110 = sphi 0, %s107
      %s111 = sphi 0, %s110
      %s127 = sphi 0, %s111
    $region4: #{tpu_custom_call.1} parent=1 // loop_header_branch
      %20 = sbr.rel (%p18) target = $region8
    $region5: #{tpu_custom_call.1} parent=1 // loop_body
      %s22 = ssub.s32 %s17, 1
      %s23 = ssub.s32 %s17, 2
      %s30 = sadd.s32 1, %s25
      %p31 = scmp.ge.s32.totalorder %s30, 4
      %s32 = scalar_select %p31, 0, %s30
      %s33 = sadd.s32 1, %s24
      %s34 = scalar_select %p31, %s33, %s24
      %p35 = scmp.ge.s32.totalorder %s34, 1
      %s36 = scalar_select %p35, 0, %s34
      %p37 = scmp.lt.s32.totalorder %s25, 1
      %s38 = scalar_select %p37, %s25, 1
      %p39 = scmp.lt.s32.totalorder %s32, 1
      %s40 = scalar_select %p39, %s32, 1
      %s41 = ssub.s32 %s24, %s36
      %s42 = ssub.s32 %s38, %s40
      %s43 = sor.u32 %s41, %s42
      %p44 = scmp.eq.s32.totalorder %s43, 0
      %s46 = sadd.s32 %s45, 1
      %s47 = scalar_select %p44, %s45, %s46
      %p50 = pneg %p44
      %p51 = scmp.eq.s32.totalorder %s17, 3
      %p52 = por %p50, %p51
      %p53 = scmp.ne.s32.totalorder %s45, %s48
      %p54 = scmp.eq.s32.totalorder %s17, 0
      %p55 = por %p53, %p54
      %p56 = scmp.ne.s32.totalorder %s45, %s48
      %p57 = scmp.eq.s32.totalorder %s22, 3
      %p58 = por %p56, %p57
      %p59 = scmp.ne.s32.totalorder %s48, %s49
      %p60 = scmp.eq.s32.totalorder %s22, 0
      %p61 = por %p59, %p60
      %p62 = scmp.ne.s32.totalorder %s48, %s49
      %p63 = scmp.eq.s32.totalorder %s23, 3
      %p64 = por %p62, %p63
      %p66 = scmp.ne.s32.totalorder %s49, %s65
      %p67 = scmp.eq.s32.totalorder %s23, 0
      %p68 = por %p66, %p67
      %s69 = ssub.s32 %s25, 2
      %p70 = scmp.gt.s32.totalorder %s69, 0
      %s71 = scalar_select %p70, %s69, 0
      %s72 = ssub.s32 %s32, 2
      %p73 = scmp.gt.s32.totalorder %s72, 0
      %s74 = scalar_select %p73, %s72, 0
      %s75 = ssub.s32 %s24, %s36
      %s76 = ssub.s32 %s71, %s74
      %s77 = sor.u32 %s75, %s76
      %p78 = scmp.eq.s32.totalorder %s77, 0
      %s80 = sadd.s32 %s79, 1
      %s81 = scalar_select %p78, %s79, %s80
      %p84 = pneg %p78
      %p85 = scmp.eq.s32.totalorder %s17, 3
      %p86 = por %p84, %p85
      %p87 = scmp.ne.s32.totalorder %s79, %s82
      %p88 = scmp.eq.s32.totalorder %s17, 0
      %p89 = por %p87, %p88
      %p90 = scmp.ne.s32.totalorder %s79, %s82
      %p91 = scmp.eq.s32.totalorder %s22, 3
      %p92 = por %p90, %p91
      %p93 = scmp.ne.s32.totalorder %s82, %s83
      %p94 = scmp.eq.s32.totalorder %s22, 0
      %p95 = por %p93, %p94
      %p96 = scmp.ne.s32.totalorder %s82, %s83
      %p97 = scmp.eq.s32.totalorder %s23, 3
      %p98 = por %p96, %p97
      %p100 = scmp.ne.s32.totalorder %s83, %s99
      %p101 = scmp.eq.s32.totalorder %s23, 0
      %p102 = por %p100, %p101
      %s103 = ssub.s32 %s24, %s36
      %s104 = ssub.s32 %s25, %s32
      %s105 = sor.u32 %s103, %s104
      %p106 = scmp.eq.s32.totalorder %s105, 0
      %s108 = sadd.s32 %s107, 1
      %s109 = scalar_select %p106, %s107, %s108
      %p112 = pneg %p106
      %p113 = scmp.eq.s32.totalorder %s17, 3
      %p114 = por %p112, %p113
      %p115 = scmp.ne.s32.totalorder %s107, %s110
      %p116 = scmp.eq.s32.totalorder %s17, 0
      %p117 = por %p115, %p116
      %p118 = scmp.ne.s32.totalorder %s107, %s110
      %p119 = scmp.eq.s32.totalorder %s22, 3
      %p120 = por %p118, %p119
      %p121 = scmp.ne.s32.totalorder %s110, %s111
      %p122 = scmp.eq.s32.totalorder %s22, 0
      %p123 = por %p121, %p122
      %p124 = scmp.ne.s32.totalorder %s110, %s111
      %p125 = scmp.eq.s32.totalorder %s23, 3
      %p126 = por %p124, %p125
      %p128 = scmp.ne.s32.totalorder %s111, %s127
      %p129 = scmp.eq.s32.totalorder %s23, 0
      %p130 = por %p128, %p129
      %p131 = scmp.le.s32.totalorder 1, %s17
      %p132 = scmp.lt.s32.totalorder %s17, 5
      %p133 = pnand %p131, %p132
      %p134 = pneg %p133
      // Predicated region
      $region9: #{tpu_custom_call.1} parent=5 // pred_check
        _
      $region10: #{tpu_custom_call.1} parent=5 // pred_check_branch
        %136 = sbr.rel (%p133) target = $region12
      $region11: #{tpu_custom_call.1} parent=5 // pred_region
        %s137 = ssub.s32 %s17, 1
      $region12: #{tpu_custom_call.1} parent=5 // pred_fallthru
        _
      %p138 = scmp.lt.s32.totalorder %s17, 4
      // Predicated region
      $region13: #{tpu_custom_call.1} parent=5 // pred_check
        %p139 = pneg %p138
      $region14: #{tpu_custom_call.1} parent=5 // pred_check_branch
        %141 = sbr.rel (%p139) target = $region16
      $region15: #{tpu_custom_call.1} parent=5 // pred_region
        // Predicated region
        $region17: #{tpu_custom_call.1} parent=15 // pred_check
          %p142 = pneg %p55
        $region18: #{tpu_custom_call.1} parent=15 // pred_check_branch
          %144 = sbr.rel (%p142) target = $region20
        $region19: #{tpu_custom_call.1} parent=15 // pred_region
          %s145 = sand.u32 %s45, 1
          %s146 = scalar_lea.sflag [#allocation3], %s145
          %s147 = sand.u32 %s45, 1
          %s148 = smul.addr %s147, 8
          %s149 = scalar_lea.vmem [#allocation2], %s148
          %p150 = scmp.lt.s32.totalorder %s25, 1
          %s151 = scalar_select %p150, %s25, 1
          %s152 = smul.u32 4, %s151
          %s154 = ssub.s32 128, 128
          %155 = vsyncadd %s146, %s154
          %s156 = smul.addr %s24, 8
          %s157 = sadd.s32 %s152, %s156
          %s158 = smul.addr %s157, 32
          %s159 = scalar_lea.hbm %s0, %s158
          %s161 = sshll.u32 %s149, 4
          %s162 = int_to_ptr.vmem [resolvable:$true] %s161
          %164 = dma.hbm_to_vmem [thread:$0]  %s159, 128, %s162, %s146
        $region20: #{tpu_custom_call.1} parent=15 // pred_fallthru
          _
        // Predicated region
        $region21: #{tpu_custom_call.1} parent=15 // pred_check
          %p165 = pneg %p89
        $region22: #{tpu_custom_call.1} parent=15 // pred_check_branch
          %167 = sbr.rel (%p165) target = $region24
        $region23: #{tpu_custom_call.1} parent=15 // pred_region
          %s168 = sand.u32 %s79, 1
          %s169 = scalar_lea.sflag [#allocation6], %s168
          %s170 = sand.u32 %s79, 1
          %s171 = smul.addr %s170, 8
          %s172 = scalar_lea.vmem [#allocation5], %s171
          %s173 = ssub.s32 %s25, 2
          %p174 = scmp.gt.s32.totalorder %s173, 0
          %s175 = scalar_select %p174, %s173, 0
          %s176 = smul.u32 4, %s175
          %s178 = ssub.s32 128, 128
          %179 = vsyncadd %s169, %s178
          %s180 = smul.addr %s24, 8
          %s181 = sadd.s32 %s176, %s180
          %s182 = smul.addr %s181, 32
          %s183 = scalar_lea.hbm %s1, %s182
          %s185 = sshll.u32 %s172, 4
          %s186 = int_to_ptr.vmem [resolvable:$true] %s185
          %188 = dma.hbm_to_vmem [thread:$0]  %s183, 128, %s186, %s169
        $region24: #{tpu_custom_call.1} parent=15 // pred_fallthru
          _
      $region16: #{tpu_custom_call.1} parent=5 // pred_fallthru
        _
      %p189 = scmp.le.s32.totalorder 1, %s17
      %p190 = scmp.lt.s32.totalorder %s17, 5
      %p191 = pnand %p189, %p190
      %p192 = pneg %p191
      // Predicated region
      $region25: #{tpu_custom_call.1} parent=5 // pred_check
        _
      $region26: #{tpu_custom_call.1} parent=5 // pred_check_branch
        %194 = sbr.rel (%p191) target = $region28
      $region27: #{tpu_custom_call.1} parent=5 // pred_region
        %s195 = ssub.s32 %s17, 1
        %s196 = sand.u32 %s48, 1
        %s197 = scalar_lea.sflag [#allocation3], %s196
        %s198 = sand.u32 %s48, 1
        %s199 = smul.addr %s198, 8
        %s200 = scalar_lea.vmem [#allocation2], %s199
        // Predicated region
        $region29: #{tpu_custom_call.1} parent=27 // pred_check
          %p201 = pneg %p61
        $region30: #{tpu_custom_call.1} parent=27 // pred_check_branch
          %203 = sbr.rel (%p201) target = $region32
        $region31: #{tpu_custom_call.1} parent=27 // pred_region
          %204 = dma.done %s197, 128
        $region32: #{tpu_custom_call.1} parent=27 // pred_fallthru
          _
        %s205 = sand.u32 %s82, 1
        %s206 = scalar_lea.sflag [#allocation6], %s205
        %s207 = sand.u32 %s82, 1
        %s208 = smul.addr %s207, 8
        %s209 = scalar_lea.vmem [#allocation5], %s208
        // Predicated region
        $region33: #{tpu_custom_call.1} parent=27 // pred_check
          %p210 = pneg %p95
        $region34: #{tpu_custom_call.1} parent=27 // pred_check_branch
          %212 = sbr.rel (%p210) target = $region36
        $region35: #{tpu_custom_call.1} parent=27 // pred_region
          %213 = dma.done %s206, 128
        $region36: #{tpu_custom_call.1} parent=27 // pred_fallthru
          _
        %s214 = sand.u32 %s48, 1
        %s215 = scalar_lea.sflag [#allocation3], %s214
        %s216 = sand.u32 %s48, 1
        %s217 = smul.addr %s216, 8
        %s218 = scalar_lea.vmem [#allocation2], %s217
        %p219 = pneg %p61
        %p220 = pneg %p58
        %s221 = sand.u32 %s82, 1
        %s222 = scalar_lea.sflag [#allocation6], %s221
        %s223 = sand.u32 %s82, 1
        %s224 = smul.addr %s223, 8
        %s225 = scalar_lea.vmem [#allocation5], %s224
        %p226 = pneg %p95
        %p227 = pneg %p92
        %p228 = pneg %p123
        %p229 = pneg %p120
        %s230 = sand.u32 %s110, 1
        %s231 = scalar_lea.sflag [#allocation4], %s230
        %s232 = sand.u32 %s110, 1
        %s233 = smul.addr %s232, 8
        %s234 = scalar_lea.vmem [#allocation7], %s233
        %p235 = scmp.lt.s32.totalorder %s27, 1
        %s236 = scalar_select %p235, %s27, 1
        %s237 = smul.u32 4, %s236
        %s238 = ssub.s32 %s27, 2
        %p239 = scmp.gt.s32.totalorder %s238, 0
        %s240 = scalar_select %p239, %s238, 0
        %s241 = smul.u32 4, %s240
        %s242 = smul.u32 4, %s27
        %p243 = scmp.lt.s32.totalorder %s27, 2
        // Predicated region
        $region37: #{tpu_custom_call.1} parent=27 // pred_check
          %p244 = pneg %p243
        $region38: #{tpu_custom_call.1} parent=27 // pred_check_branch
          %246 = sbr.rel (%p244) target = $region40
        $region39: #{tpu_custom_call.1} parent=27 // pred_region
          %v247 = vld [vmem:[%s200] sm:$0xff]
          %248 = vst [vmem:[%s234] sm:$0xff] %v247
        $region40: #{tpu_custom_call.1} parent=27 // pred_fallthru
          _
        %p249 = scmp.ge.s32.totalorder %s27, 2
        // Predicated region
        $region41: #{tpu_custom_call.1} parent=27 // pred_check
          %p250 = pneg %p249
        $region42: #{tpu_custom_call.1} parent=27 // pred_check_branch
          %252 = sbr.rel (%p250) target = $region44
        $region43: #{tpu_custom_call.1} parent=27 // pred_region
          %v253 = vld [vmem:[%s209] sm:$0xff]
          %254 = vst [vmem:[%s234] sm:$0xff] %v253
        $region44: #{tpu_custom_call.1} parent=27 // pred_fallthru
          _
        %s255 = sand.u32 %s110, 1
        %s256 = scalar_lea.sflag [#allocation4], %s255
        %s257 = sand.u32 %s110, 1
        %s258 = smul.addr %s257, 8
        %s259 = scalar_lea.vmem [#allocation7], %s258
        // Predicated region
        $region45: #{tpu_custom_call.1} parent=27 // pred_check
          %p260 = pneg %p120
        $region46: #{tpu_custom_call.1} parent=27 // pred_check_branch
          %262 = sbr.rel (%p260) target = $region48
        $region47: #{tpu_custom_call.1} parent=27 // pred_region
          %s263 = smul.u32 4, %s27
          %s265 = ssub.s32 128, 128
          %266 = vsyncadd %s256, %s265
          %s267 = smul.addr %s26, 16
          %s268 = sadd.s32 %s263, %s267
          %s269 = smul.addr %s268, 32
          %s270 = scalar_lea.hbm %s2, %s269
          %s272 = sshll.u32 %s259, 4
          %s273 = int_to_ptr.vmem [resolvable:$true] %s272
          %275 = dma.vmem_to_hbm [thread:$0]  %s273, 128, %s270, %s256
        $region48: #{tpu_custom_call.1} parent=27 // pred_fallthru
          _
      $region28: #{tpu_custom_call.1} parent=5 // pred_fallthru
        _
      %p276 = scmp.le.s32.totalorder 2, %s17
      // Predicated region
      $region49: #{tpu_custom_call.1} parent=5 // pred_check
        %p277 = pneg %p276
      $region50: #{tpu_custom_call.1} parent=5 // pred_check_branch
        %279 = sbr.rel (%p277) target = $region52
      $region51: #{tpu_custom_call.1} parent=5 // pred_region
        %s280 = ssub.s32 %s17, 2
        // Predicated region
        $region53: #{tpu_custom_call.1} parent=51 // pred_check
          %p281 = pneg %p126
        $region54: #{tpu_custom_call.1} parent=51 // pred_check_branch
          %283 = sbr.rel (%p281) target = $region56
        $region55: #{tpu_custom_call.1} parent=51 // pred_region
          %s284 = sand.u32 %s111, 1
          %s285 = scalar_lea.sflag [#allocation4], %s284
          %s286 = sand.u32 %s111, 1
          %s287 = smul.addr %s286, 8
          %s288 = scalar_lea.vmem [#allocation7], %s287
          %289 = dma.done %s285, 128
        $region56: #{tpu_custom_call.1} parent=51 // pred_fallthru
          _
      $region52: #{tpu_custom_call.1} parent=5 // pred_fallthru
        _
    $region6: #{tpu_custom_call.1} parent=1 // loop_footer
      %s21 = sadd.s32 1, %s17
    $region7: #{tpu_custom_call.1} parent=1 // loop_footer_branch
      %16 = sbr.rel target = $region3
    $region8: #{tpu_custom_call.1} parent=1 // loop_exit
      _
    %290 = vsyncpa [#allocation3], 1
    %s291 = scalar_lea.sflag [#allocation3], 1
    %292 = vsyncpa %s291, 1
    %293 = vsyncpa [#allocation6], 1
    %s294 = scalar_lea.sflag [#allocation6], 1
    %295 = vsyncpa %s294, 1
    %296 = vsyncpa [#allocation4], 1
    %s297 = scalar_lea.sflag [#allocation4], 1
    %298 = vsyncpa %s297, 1

</llo_original>
